<compile_context>
chip_gen: v7x
topology: tpu7x:2x2x1
jax: 0.10.0
libtpu: 0.0.40
codegen_flags: <defaults>
</compile_context>

<pallas_src>
import functools

import jax
import jax.numpy as jnp
from jax.experimental import pallas as pl
from jax.experimental.pallas import tpu as pltpu

EPS = 1e-12                 # F.normalize default eps
_NODE_ALIGN = 32            # row alignment (covers f32 / bf16 / int8 packing)
_ROW_TILE_TARGET = 1024     # node-row tile target (all stages)
_K_TILE_TARGET = 4096       # reduction (source-node) tile target (aggregation)


def _round_up(x, m):
    return ((x + m - 1) // m) * m


def _vmem_limit_bytes():
    """Generation-aware scoped-VMEM budget (~3/4 of per-core physical VMEM)."""
    cap = 64 * 1024 * 1024                       # conservative default (v7x)
    try:
        cap = int(getattr(pltpu.get_tpu_info(), "vmem_capacity_bytes", cap))
    except Exception:
        pass
    return (cap * 3) // 4                         # ~48 MiB v7x, ~96 MiB v5e/v6e


def _l2_normalize_rows(x):
    # x / max(||x||, eps) == x * rsqrt(max(||x||^2, eps^2))   (EUP rsqrt, no divide)
    ss = jnp.sum(x * x, axis=1, keepdims=True)
    return x * jax.lax.rsqrt(jnp.maximum(ss, EPS * EPS))


# ---------------------------------------------------------------------------
# Kernels
# ---------------------------------------------------------------------------

def dense_kernel(x_ref, w_ref, b_ref, o_ref, *, relu, normalize):
    """Row-tiled dense layer: o = [l2norm]( [relu]( x @ w + b ) )."""
    y = jnp.dot(x_ref[...], w_ref[...], preferred_element_type=jnp.float32) + b_ref[...]
    if relu:
        y = jnp.maximum(y, 0.0)
    if normalize:
        y = _l2_normalize_rows(y)
    o_ref[...] = y.astype(o_ref.dtype)


def aggregate_update_kernel(a_ref, hb_ref, ha_ref, bu_ref, o_ref, acc_ref,
                            *, hb_resident_tk):
    """Tiled scatter-add (adjacency matmul) + folded GraphConv update epilogue.

    grid = (row_tiles, k_tiles); k (source-node) axis is the reduction axis.
        acc += A[i, k] @ h_b[k]          (A streamed as int8, upcast in VMEM)
        at last k:  o[i] = l2norm(relu(h_a[i] + acc + bu))
    lin_self / lin_neigh / lin_update were pre-folded into h_a / h_b on the
    host, so the epilogue has no matmuls and the f32 accumulator never gets
    rounded to bf16.
    """
    k = pl.program_id(1)

    @pl.when(k == 0)
    def _():
        acc_ref[...] = jnp.zeros_like(acc_ref)

    if hb_resident_tk is None:                     # streamed (tk, Hp) tiles
        hb = hb_ref[...]
    else:                                          # VMEM-resident h_b, slice it
        start = pl.multiple_of(k * hb_resident_tk, hb_resident_tk)
        hb = hb_ref[pl.ds(start, hb_resident_tk), :]

    acc_ref[...] += jnp.dot(a_ref[...].astype(hb.dtype), hb,
                            preferred_element_type=jnp.float32)

    @pl.when(k == pl.num_programs(1) - 1)
    def _():
        h_new = acc_ref[...] + ha_ref[...].astype(jnp.float32) + bu_ref[...]
        h_new = jnp.maximum(h_new, 0.0)
        o_ref[...] = _l2_normalize_rows(h_new).astype(o_ref.dtype)


# ---------------------------------------------------------------------------
# pallas_call wrappers
# ---------------------------------------------------------------------------

def _dense_call(x, w, b, *, relu, normalize, out_dtype, tm, vmem_limit):
    np_, d_in = x.shape
    d_out = w.shape[1]
    n_rows = np_ // tm
    in_b = jnp.dtype(x.dtype).itemsize
    cost = pl.CostEstimate(
        flops=2 * np_ * d_in * d_out,
        transcendentals=0,
        bytes_accessed=(np_ * d_in + d_in * d_out + d_out) * in_b
        + np_ * d_out * jnp.dtype(out_dtype).itemsize,
    )
    kern = functools.partial(dense_kernel, relu=relu, normalize=normalize)
    return pl.pallas_call(
        kern,
        out_shape=jax.ShapeDtypeStruct((np_, d_out), out_dtype),
        grid_spec=pltpu.PrefetchScalarGridSpec(
            num_scalar_prefetch=0,
            grid=(n_rows,),
            in_specs=[
                pl.BlockSpec((tm, d_in), lambda i: (i, 0)),
                pl.BlockSpec((d_in, d_out), lambda i: (0, 0)),   # weights VMEM-resident
                pl.BlockSpec((1, d_out), lambda i: (0, 0)),
            ],
            out_specs=pl.BlockSpec((tm, d_out), lambda i: (i, 0)),
        ),
        compiler_params=pltpu.CompilerParams(
            dimension_semantics=("parallel",),
            vmem_limit_bytes=vmem_limit,
        ),
        cost_estimate=cost,
    )(x, w, b)


def _aggregate_update_call(adj, h_ab, bu, *, out_dtype, tm, tk, hp,
                           hb_resident, vmem_limit):
    np_, nk = adj.shape
    n_rows, n_k = np_ // tm, nk // tk
    mm_b = jnp.dtype(h_ab.dtype).itemsize
    out_b = jnp.dtype(out_dtype).itemsize

    if hb_resident:
        # h_b fetched once (constant block index) and kept VMEM-resident.
        hb_spec = pl.BlockSpec((nk, hp), lambda i, k: (0, 1))
        hb_tk = tk
        hb_bytes = nk * hp * mm_b
    else:
        hb_spec = pl.BlockSpec((tk, hp), lambda i, k: (k, 1))
        hb_tk = None
        hb_bytes = n_rows * nk * hp * mm_b

    cost = pl.CostEstimate(
        flops=2 * np_ * nk * hp,
        transcendentals=0,
        bytes_accessed=np_ * nk                      # int8 adjacency stream
        + hb_bytes + np_ * hp * mm_b + hp * 4 + np_ * hp * out_b,
    )
    kern = functools.partial(aggregate_update_kernel, hb_resident_tk=hb_tk)
    # NOTE: if profiling shows exposed adjacency DMA, sweep
    # pipeline_mode=pl.Buffered(3) on the adjacency BlockSpec (costs 1 extra A tile).
    return pl.pallas_call(
        kern,
        out_shape=jax.ShapeDtypeStruct((np_, hp), out_dtype),
        grid_spec=pltpu.PrefetchScalarGridSpec(
            num_scalar_prefetch=0,
            grid=(n_rows, n_k),
            in_specs=[
                pl.BlockSpec((tm, tk), lambda i, k: (i, k)),     # int8 adjacency tile
                hb_spec,                                         # h_b = h_ab[:, hp:2hp]
                pl.BlockSpec((tm, hp), lambda i, k: (i, 0)),     # h_a = h_ab[:, :hp]
                pl.BlockSpec((1, hp), lambda i, k: (0, 0)),      # bu
            ],
            out_specs=pl.BlockSpec((tm, hp), lambda i, k: (i, 0)),
            scratch_shapes=[pltpu.VMEM((tm, hp), jnp.float32)],
        ),
        compiler_params=pltpu.CompilerParams(
            dimension_semantics=("parallel", "arbitrary"),
            vmem_limit_bytes=vmem_limit,
        ),
        cost_estimate=cost,
    )(adj, h_ab, h_ab, bu)


# ---------------------------------------------------------------------------
# Tile selection (generation-aware)
# ---------------------------------------------------------------------------

def _choose_tiles(num_nodes, hp, mm_bytes, out_bytes, vmem_limit):
    """Pick (tm, tk, Np, hb_resident).

    - tm: node-row tile, 128-aligned when the graph allows >= 2 row tiles
      (keeps both v7x TensorCores fed via the "parallel" axis).
    - tk: reduction tile (multiple of tm), as large as the VMEM budget allows.
    - Np: padded node count (multiple of tk, hence of tm).
    - hb_resident: keep h_b fully VMEM-resident when it fits.
    """
    n_al = _round_up(max(int(num_nodes), 1), _NODE_ALIGN)

    if n_al >= 2 * 128:
        tm = min(_ROW_TILE_TARGET, max(128, _round_up(n_al, 256) // 2))
    else:
        tm = n_al                               # tiny graph: single full row tile
    np0 = _round_up(n_al, tm)

    budget = (vmem_limit * 3) // 4              # headroom for Mosaic internals

    def fits(tk_, resident):
        np_ = _round_up(np0, tk_)
        hb = (2 * np_ * hp * mm_bytes) if resident else (2 * tk_ * hp * mm_bytes)
        total = (2 * tm * tk_                    # int8 A tiles, double-buffered
                 + hb
                 + 2 * tm * hp * mm_bytes        # h_a tiles
                 + 2 * tm * hp * out_bytes       # output tiles
                 + tm * hp * 4                   # f32 accumulator
                 + 2 * hp * 4)                   # bias
        return total <= budget

    tk = min(_K_TILE_TARGET, np0)
    tk = max(tm, (tk // tm) * tm)
    while tk > tm and not fits(tk, False):
        tk = max(tm, ((tk // 2) // tm) * tm)

    np_pad = _round_up(np0, tk)
    hb_resident = fits(tk, True)
    assert tk == np_pad or tk % 128 == 0         # lane-aligned adjacency blocks
    return tm, tk, np_pad, hb_resident


# ---------------------------------------------------------------------------
# Parameters & forward
# ---------------------------------------------------------------------------

def make_params(key, in_channels, hidden_channels, out_channels, num_layers=2):
    """Deterministic synthetic parameters (PyTorch Linear convention: W [out,in], b [out])."""
    def linear(k, fan_in, fan_out):
        kw, kb = jax.random.split(k)
        bound = 1.0 / jnp.sqrt(fan_in)
        w = jax.random.uniform(kw, (fan_out, fan_in), jnp.float32, -bound, bound)
        b = jax.random.uniform(kb, (fan_out,), jnp.float32, -bound, bound)
        return w, b

    keys = jax.random.split(key, 2 + 3 * num_layers)
    params = {"input_proj": linear(keys[0], in_channels, hidden_channels), "convs": []}
    for i in range(num_layers):
        k_self, k_neigh, k_upd = keys[1 + 3 * i], keys[2 + 3 * i], keys[3 + 3 * i]
        params["convs"].append({
            "lin_self": linear(k_self, hidden_channels, hidden_channels),
            "lin_neigh": linear(k_neigh, hidden_channels, hidden_channels),
            "lin_update": linear(k_upd, 2 * hidden_channels, hidden_channels),
        })
    params["output_proj"] = linear(keys[-1], hidden_channels, out_channels)
    return params


def pinsage_forward(params, x, edge_index, hidden_channels, out_channels,
                    *, matmul_dtype=jnp.bfloat16):
    """PinSage forward (edge_index path) using the Pallas kernels above."""
    num_nodes, in_channels = x.shape
    H = hidden_channels
    mm_dt = jnp.dtype(matmul_dtype)

    # Lane-dense (128-padded) feature dims.
    Hp = _round_up(H, 128)
    Op = _round_up(out_channels, 128)
    Dp = _round_up(in_channels, 128)

    vmem_limit = _vmem_limit_bytes()
    tm, tk, Np, hb_resident = _choose_tiles(num_nodes, Hp, mm_dt.itemsize,
                                            mm_dt.itemsize, vmem_limit)

    # int8 adjacency A[dst, src] = edge multiplicity (aggr='add', unit edge
    # weights), built directly in int8 (no O(N^2) f32 intermediate); zero pad.
    # Exact for multiplicities <= 127 (unit edges here).
    src, dst = edge_index[0], edge_index[1]
    adj = jnp.zeros((Np, Np), jnp.int8).at[dst, src].add(
        jnp.ones(src.shape, jnp.int8))

    def pad_w(w_t, rows, cols):        # pre-transposed [in, out] -> zero-padded
        w_t = jnp.asarray(w_t, jnp.float32)
        return jnp.zeros((rows, cols), jnp.float32).at[:w_t.shape[0], :w_t.shape[1]].set(w_t)

    def pad_b(b, cols):
        b = jnp.asarray(b, jnp.float32)
        return jnp.zeros((1, cols), jnp.float32).at[0, :b.shape[0]].set(b)

    wi, bi = params["input_proj"]
    wo, bo = params["output_proj"]
    wi_p = pad_w(jnp.asarray(wi).T, Dp, Hp).astype(mm_dt)
    bi_p = pad_b(bi, Hp)
    wo_p = pad_w(jnp.asarray(wo).T, Hp, Op).astype(mm_dt)
    bo_p = pad_b(bo, Op)

    xp = (jnp.zeros((Np, Dp), jnp.float32)
          .at[:num_nodes, :in_channels].set(jnp.asarray(x, jnp.float32))
          .astype(mm_dt))

    # h = relu(x @ Wi + bi)
    h = _dense_call(xp, wi_p, bi_p, relu=True, normalize=False,
                    out_dtype=mm_dt, tm=tm, vmem_limit=vmem_limit)

    for layer in params["convs"]:
        ws, bs = layer["lin_self"]
        wn, bn = layer["lin_neigh"]
        wu, bu = layer["lin_update"]
        ws_t = jnp.asarray(ws, jnp.float32).T       # [H, H]
        wn_t = jnp.asarray(wn, jnp.float32).T       # [H, H]
        wu_t = jnp.asarray(wu, jnp.float32).T       # [2H, H]
        wua, wub = wu_t[:H], wu_t[H:]

        # Fold lin_update into the fused self/neigh matmul (exact, linear comp.):
        #   h_a = h @ (Ws^T Wua) + bs Wua   == lin_self(h)  @ Wua
        #   h_b = h @ (Wn^T Wub) + bn Wub   == lin_neigh(h) @ Wub
        #   h'  = l2norm(relu(h_a + A @ h_b + bu))
        w_ab = jnp.zeros((Hp, 2 * Hp), jnp.float32)
        w_ab = w_ab.at[:H, :H].set(ws_t @ wua)
        w_ab = w_ab.at[:H, Hp:Hp + H].set(wn_t @ wub)
        b_ab = jnp.zeros((1, 2 * Hp), jnp.float32)
        b_ab = b_ab.at[0, :H].set(jnp.asarray(bs, jnp.float32) @ wua)
        b_ab = b_ab.at[0, Hp:Hp + H].set(jnp.asarray(bn, jnp.float32) @ wub)
        bu_p = pad_b(bu, Hp)

        h_ab = _dense_call(h, w_ab.astype(mm_dt), b_ab, relu=False, normalize=False,
                           out_dtype=mm_dt, tm=tm, vmem_limit=vmem_limit)
        h = _aggregate_update_call(adj, h_ab, bu_p, out_dtype=mm_dt,
                                   tm=tm, tk=tk, hp=Hp,
                                   hb_resident=hb_resident, vmem_limit=vmem_limit)

    emb = _dense_call(h, wo_p, bo_p, relu=False, normalize=True,
                      out_dtype=jnp.float32, tm=tm, vmem_limit=vmem_limit)
    return emb[:num_nodes, :out_channels]


def pinsage_reference(params, x, edge_index, hidden_channels):
    """Pure-JAX f32 reference reproducing the PyTorch forward (edge_index path)."""
    num_nodes = x.shape[0]
    src, dst = edge_index[0], edge_index[1]
    adj = jnp.zeros((num_nodes, num_nodes), jnp.float32).at[dst, src].add(1.0)

    def lin(w_b, h):
        w, b = w_b
        return h @ w.T + b

    def l2n(v):
        n = jnp.sqrt(jnp.sum(v * v, axis=1, keepdims=True))
        return v / jnp.maximum(n, EPS)

    h = jax.nn.relu(lin(params["input_proj"], x))
    for layer in params["convs"]:
        h_self = lin(layer["lin_self"], h)
        h_neigh = adj @ lin(layer["lin_neigh"], h)
        h = jax.nn.relu(lin(layer["lin_update"],
                            jnp.concatenate([h_self, h_neigh], axis=1)))
        h = l2n(h)
    return l2n(lin(params["output_proj"], h))


if __name__ == "__main__":
    num_nodes = 8
    in_channels = 16
    hidden_channels = 32
    out_channels = 32
    num_layers = 2

    key = jax.random.PRNGKey(0)
    k_params, k_x = jax.random.split(key)

    params = make_params(k_params, in_channels, hidden_channels, out_channels, num_layers)
    x = jax.random.normal(k_x, (num_nodes, in_channels), jnp.float32)

    # small deterministic directed ring graph (both directions): 16 edges
    src = jnp.concatenate([jnp.arange(num_nodes), jnp.arange(num_nodes)])
    dst = jnp.concatenate([(jnp.arange(num_nodes) + 1) % num_nodes,
                           (jnp.arange(num_nodes) - 1) % num_nodes])
    edge_index = jnp.stack([src, dst]).astype(jnp.int32)  # [2, 16]

    ref = pinsage_reference(params, x, edge_index, hidden_channels)

    # f32 path: matches the f32 reference tightly (weight folding is exact math).
    out_f32 = pinsage_forward(params, x, edge_index, hidden_channels, out_channels,
                              matmul_dtype=jnp.float32)
    out_f32 = jax.block_until_ready(out_f32)
    assert out_f32.shape == (num_nodes, out_channels)
    assert jnp.allclose(out_f32, ref, rtol=1e-3, atol=1e-3), "f32 mismatch vs reference"

    # bf16 path (default fast path): looser tolerance vs the f32 reference.
    out_bf16 = pinsage_forward(params, x, edge_index, hidden_channels, out_channels,
                               matmul_dtype=jnp.bfloat16)
    out_bf16 = jax.block_until_ready(out_bf16)
    assert out_bf16.shape == (num_nodes, out_channels)
    assert jnp.allclose(out_bf16, ref, rtol=5e-2, atol=5e-2), "bf16 mismatch vs reference"

    print("KERNEL_OK")
</pallas_src>

<mosaic_0001>
module attributes {stable_mosaic.version = 11 : i64} {
  func.func @dense_kernel(%arg0: i32, %arg1: memref<32x128xf32, #tpu.memory_space<vmem>>, %arg2: memref<128x128xf32, #tpu.memory_space<vmem>>, %arg3: memref<1x128xf32, #tpu.memory_space<vmem>>, %arg4: memref<32x128xf32, #tpu.memory_space<vmem>>) attributes {dimension_semantics = [#tpu.dimension_semantics<parallel>], iteration_bounds = array<i64: 1>, scalar_prefetch = 0 : i64, scratch_operands = 0 : i64, tpu.core_type = #tpu.core_type<tc>, window_params = [{transform_indices = @transform_0, window_bounds = array<i64: 32, 128>}, {pipeline_mode = #tpu.pipeline_mode<synchronous>, transform_indices = @transform_1, window_bounds = array<i64: 128, 128>}, {pipeline_mode = #tpu.pipeline_mode<synchronous>, transform_indices = @transform_2, window_bounds = array<i64: 1, 128>}, {transform_indices = @transform_3, window_bounds = array<i64: 32, 128>}]} {
    %c0 = arith.constant 0 : index
    %c0_0 = arith.constant 0 : index
    %0 = vector.load %arg1[%c0, %c0_0] : memref<32x128xf32, #tpu.memory_space<vmem>>, vector<32x128xf32>
    %c0_1 = arith.constant 0 : index
    %c0_2 = arith.constant 0 : index
    %1 = vector.load %arg2[%c0_1, %c0_2] : memref<128x128xf32, #tpu.memory_space<vmem>>, vector<128x128xf32>
    %cst = arith.constant dense<0.000000e+00> : vector<32x128xf32>
    %2 = tpu.matmul %0, %1, %cst {dimension_numbers = #tpu.dot_dimension_numbers<[1], [0], [0], [1], [0, 0, 1, 1], [], []>} : vector<32x128xf32>, vector<128x128xf32>, vector<32x128xf32> -> vector<32x128xf32>
    %c0_3 = arith.constant 0 : index
    %c0_4 = arith.constant 0 : index
    %3 = vector.load %arg3[%c0_3, %c0_4] : memref<1x128xf32, #tpu.memory_space<vmem>>, vector<1x128xf32>
    %4 = vector.broadcast %3 : vector<1x128xf32> to vector<32x128xf32>
    %5 = arith.addf %2, %4 : vector<32x128xf32>
    %cst_5 = arith.constant 0.000000e+00 : f32
    %6 = vector.broadcast %cst_5 : f32 to vector<32x128xf32>
    %7 = arith.maximumf %5, %6 : vector<32x128xf32>
    %c0_6 = arith.constant 0 : index
    %c0_7 = arith.constant 0 : index
    %8 = vector.load %arg4[%c0_6, %c0_7] : memref<32x128xf32, #tpu.memory_space<vmem>>, vector<32x128xf32>
    tpu.vector_store %arg4[%c0_6, %c0_7], %7 {strides = array<i32>} : memref<32x128xf32, #tpu.memory_space<vmem>>, vector<32x128xf32>,
    return
  }
  func.func @transform_0(%arg0: i32) -> (i32, i32) {
    %c0_i32 = arith.constant 0 : i32
    %c0_i32_0 = arith.constant 0 : i32
    return %arg0, %c0_i32 : i32, i32
  }
  func.func @transform_1(%arg0: i32) -> (i32, i32) {
    %c0_i32 = arith.constant 0 : i32
    %c0_i32_0 = arith.constant 0 : i32
    %c0_i32_1 = arith.constant 0 : i32
    return %c0_i32, %c0_i32_0 : i32, i32
  }
  func.func @transform_2(%arg0: i32) -> (i32, i32) {
    %c0_i32 = arith.constant 0 : i32
    %c0_i32_0 = arith.constant 0 : i32
    %c0_i32_1 = arith.constant 0 : i32
    return %c0_i32, %c0_i32_0 : i32, i32
  }
  func.func @transform_3(%arg0: i32) -> (i32, i32) {
    %c0_i32 = arith.constant 0 : i32
    %c0_i32_0 = arith.constant 0 : i32
    return %arg0, %c0_i32 : i32, i32
  }
}

</mosaic_0001>

<llo_original>
// kernel: tpu_custom_call.1
$region0: #{tpu_custom_call.1}
  #allocation0 [shape = 'u32[]', space=smem, size = 0x4, offset = 0x4, fixed_abs, tag = 'smem constant byte address 0x4 - core index']
  #allocation1 [shape = 'u32[144,128]{1,0:T(1,128)}', space=vmem, size = 0x12000, scoped, tag = 'internal scratch']
  %s0 = inlined_call_operand.hbm [shape: f32[32,128], index: 0, kind: input, shape index: {}]
  %s1 = inlined_call_operand.hbm [shape: f32[128,128], index: 1, kind: input, shape index: {}]
  %s2 = inlined_call_operand.vmem [shape: f32[1,128], index: 2, kind: input, shape index: {}]
  %s3 = inlined_call_operand.hbm [shape: f32[32,128], index: 3, kind: output, shape index: {}]
  %s4 = sld [smem:[#allocation0]]
  $region30: #{tpu_custom_call.1} parent=0
    _
  %s6 = ssub.s32 1, %s4
  %s7 = scalar_select 0, %s6, %s4
  $region1: #{tpu_custom_call.1} parent=0
    #allocation2 [shape = 'u8[16384]{0}', space=vmem, size = 0x4000, scoped, tag = 'input window, operand 0, single buffered']
    #allocation3 [shape = 's32[1]{0}', space=sflag, size = 0x4, scoped, tag = 'scoped memory for tpu_custom_call.1']
    #allocation4 [shape = 's32[1]{0}', space=sflag, size = 0x4, scoped, tag = 'scoped memory for tpu_custom_call.1']
    #allocation5 [shape = 'u8[65536]{0}', space=vmem, size = 0x10000, scoped, tag = 'input window, operand 1, single buffered']
    #allocation6 [shape = 's32[1]{0}', space=sflag, size = 0x4, scoped, tag = 'scoped memory for tpu_custom_call.1']
    #allocation7 [shape = 'u8[16384]{0}', space=vmem, size = 0x4000, scoped, tag = 'output window, operand 0, single buffered']
    %8 = vsyncpa [#allocation3], 0
    %9 = vsyncpa [#allocation6], 0
    %10 = vsyncpa [#allocation4], 0
    // Predicated region
    $region2: #{tpu_custom_call.1} parent=1 // pred_check
      _
    $region3: #{tpu_custom_call.1} parent=1 // pred_check_branch
      %12 = sbr.rel (0) target = $region5
    $region4: #{tpu_custom_call.1} parent=1 // pred_region
      %s14 = ssub.s32 512, 512
      %15 = vsyncadd [#allocation3], %s14
      %s16 = sshll.u32 [#allocation2], 4
      %s17 = int_to_ptr.vmem [resolvable:$true] %s16
      %22 = dma.hbm_to_vmem [thread:$0]  %s0, 512, %s17, [#allocation3], 128, 128, 8
    $region5: #{tpu_custom_call.1} parent=1 // pred_fallthru
      _
    // Predicated region
    $region6: #{tpu_custom_call.1} parent=1 // pred_check
      _
    $region7: #{tpu_custom_call.1} parent=1 // pred_check_branch
      %24 = sbr.rel (0) target = $region9
    $region8: #{tpu_custom_call.1} parent=1 // pred_region
      %s26 = ssub.s32 2048, 2048
      %27 = vsyncadd [#allocation6], %s26
      %s28 = sshll.u32 [#allocation5], 4
      %s29 = int_to_ptr.vmem [resolvable:$true] %s28
      %34 = dma.hbm_to_vmem [thread:$0]  %s1, 2048, %s29, [#allocation6], 128, 128, 8
    $region9: #{tpu_custom_call.1} parent=1 // pred_fallthru
      _
    // Predicated region
    $region10: #{tpu_custom_call.1} parent=1 // pred_check
      _
    $region11: #{tpu_custom_call.1} parent=1 // pred_check_branch
      %36 = sbr.rel (0) target = $region13
    $region12: #{tpu_custom_call.1} parent=1 // pred_region
      _
    $region13: #{tpu_custom_call.1} parent=1 // pred_fallthru
      _
    // Predicated region
    $region14: #{tpu_custom_call.1} parent=1 // pred_check
      _
    $region15: #{tpu_custom_call.1} parent=1 // pred_check_branch
      %38 = sbr.rel (0) target = $region17
    $region16: #{tpu_custom_call.1} parent=1 // pred_region
      %39 = dma.done [#allocation3], 512
    $region17: #{tpu_custom_call.1} parent=1 // pred_fallthru
      _
    // Predicated region
    $region18: #{tpu_custom_call.1} parent=1 // pred_check
      _
    $region19: #{tpu_custom_call.1} parent=1 // pred_check_branch
      %41 = sbr.rel (0) target = $region21
    $region20: #{tpu_custom_call.1} parent=1 // pred_region
      %42 = dma.done [#allocation6], 2048
    $region21: #{tpu_custom_call.1} parent=1 // pred_fallthru
      _
    %v43 = vld [vmem:[#allocation2] sm:$0xff]
    %v44 = vld [vmem:[#allocation2 + $0x8] sm:$0xff]
    %v45 = vld [vmem:[#allocation2 + $0x10] sm:$0xff]
    %v46 = vld [vmem:[#allocation2 + $0x18] sm:$0xff]
    %v47 = vld [vmem:[#allocation5] sm:$0xff]
    %v48 = vld [vmem:[#allocation5 + $0x8] sm:$0xff]
    %v49 = vld [vmem:[#allocation5 + $0x10] sm:$0xff]
    %v50 = vld [vmem:[#allocation5 + $0x18] sm:$0xff]
    %v51 = vld [vmem:[#allocation5 + $0x20] sm:$0xff]
    %v52 = vld [vmem:[#allocation5 + $0x28] sm:$0xff]
    %v53 = vld [vmem:[#allocation5 + $0x30] sm:$0xff]
    %v54 = vld [vmem:[#allocation5 + $0x38] sm:$0xff]
    %v55 = vld [vmem:[#allocation5 + $0x40] sm:$0xff]
    %v56 = vld [vmem:[#allocation5 + $0x48] sm:$0xff]
    %v57 = vld [vmem:[#allocation5 + $0x50] sm:$0xff]
    %v58 = vld [vmem:[#allocation5 + $0x58] sm:$0xff]
    %v59 = vld [vmem:[#allocation5 + $0x60] sm:$0xff]
    %v60 = vld [vmem:[#allocation5 + $0x68] sm:$0xff]
    %v61 = vld [vmem:[#allocation5 + $0x70] sm:$0xff]
    %v62 = vld [vmem:[#allocation5 + $0x78] sm:$0xff]
    %v63 = vld [vmem:[%s2] sm:$0x1]
    %v65 = vlaneseq
    %v66 = vshrl.u32 %v65, 7
    %v67 = vsub.s32 0, %v66
    %v68 = vrot.slane %v63, %v67
    %70 = vmatprep.subr.mxu0 0.0
    %71 = vmatpush1.msra.mxu0 %v47
    %72 = vmatprep.subr.mxu0 0.0
    %73 = vmatpush1.msra.mxu0 %v48
    %74 = vmatprep.subr.mxu0 0.0
    %75 = vmatpush1.msra.mxu0 %v49
    %76 = vmatprep.subr.mxu0 0.0
    %77 = vmatpush1.msra.mxu0 %v50
    %78 = vmatprep.subr.mxu0 0.0
    %79 = vmatpush1.msra.mxu0 %v51
    %80 = vmatprep.subr.mxu0 0.0
    %81 = vmatpush1.msra.mxu0 %v52
    %82 = vmatprep.subr.mxu0 0.0
    %83 = vmatpush1.msra.mxu0 %v53
    %84 = vmatprep.subr.mxu0 0.0
    %85 = vmatpush1.msra.mxu0 %v54
    %86 = vmatprep.subr.mxu0 0.0
    %87 = vmatpush1.msra.mxu0 %v55
    %88 = vmatprep.subr.mxu0 0.0
    %89 = vmatpush1.msra.mxu0 %v56
    %90 = vmatprep.subr.mxu0 0.0
    %91 = vmatpush1.msra.mxu0 %v57
    %92 = vmatprep.subr.mxu0 0.0
    %93 = vmatpush1.msra.mxu0 %v58
    %94 = vmatprep.subr.mxu0 0.0
    %95 = vmatpush1.msra.mxu0 %v59
    %96 = vmatprep.subr.mxu0 0.0
    %97 = vmatpush1.msra.mxu0 %v60
    %98 = vmatprep.subr.mxu0 0.0
    %99 = vmatpush1.msra.mxu0 %v61
    %100 = vmatprep.subr.mxu0 0.0
    %101 = vmatpush1.msra.mxu0 %v62
    %102 = vmatprep.subr.mxu0 0.0
    %103 = vmatpush1.msra.mxu0 0.0
    %104 = vmatprep.subr.mxu0 0.0
    %105 = vmatpush1.msra.mxu0 0.0
    %106 = vmatprep.subr.mxu0 0.0
    %107 = vmatpush1.msra.mxu0 0.0
    %108 = vmatprep.subr.mxu0 0.0
    %109 = vmatpush1.msra.mxu0 0.0
    %110 = vmatprep.subr.mxu0 0.0
    %111 = vmatpush1.msra.mxu0 0.0
    %112 = vmatprep.subr.mxu0 0.0
    %113 = vmatpush1.msra.mxu0 0.0
    %114 = vmatprep.subr.mxu0 0.0
    %115 = vmatpush1.msra.mxu0 0.0
    %116 = vmatprep.subr.mxu0 0.0
    %117 = vmatpush1.msra.mxu0 0.0
    %118 = vmatprep.subr.mxu0 0.0
    %119 = vmatpush1.msra.mxu0 0.0
    %120 = vmatprep.subr.mxu0 0.0
    %121 = vmatpush1.msra.mxu0 0.0
    %122 = vmatprep.subr.mxu0 0.0
    %123 = vmatpush1.msra.mxu0 0.0
    %124 = vmatprep.subr.mxu0 0.0
    %125 = vmatpush1.msra.mxu0 0.0
    %126 = vmatprep.subr.mxu0 0.0
    %127 = vmatpush1.msra.mxu0 0.0
    %128 = vmatprep.subr.mxu0 0.0
    %129 = vmatpush1.msra.mxu0 0.0
    %130 = vmatprep.subr.mxu0 0.0
    %131 = vmatpush1.msra.mxu0 0.0
    %132 = vmatprep.subr.mxu0 0.0
    %133 = vmatpush1.msra.mxu0 0.0
    %134 = vmatprep.mubr.f32.mxu0 0.0
    %135 = vmatmul.mubr.f32.gmra.mrb[0].mxu0 %v43
    %v136 = vpop.f32.mrb[0].mxu0
    %v137 = vadd.f32 %v68, %v136
    %v138 = vpop.f32.mrb[0].mxu0
    %139 = vmatprep.mubr.f32.mxu0 0.0
    %140 = vmatmul.mubr.f32.gmra.mrb[0].mxu0 %v44
    %v141 = vpop.f32.mrb[0].mxu0
    %v142 = vadd.f32 %v68, %v141
    %v143 = vpop.f32.mrb[0].mxu0
    %144 = vmatprep.mubr.f32.mxu0 0.0
    %145 = vmatmul.mubr.f32.gmra.mrb[0].mxu0 %v45
    %v146 = vpop.f32.mrb[0].mxu0
    %v147 = vadd.f32 %v68, %v146
    %v148 = vpop.f32.mrb[0].mxu0
    %149 = vmatprep.mubr.f32.mxu0 0.0
    %150 = vmatmul.mubr.f32.gmra.mrb[0].mxu0 %v46
    %v151 = vpop.f32.mrb[0].mxu0
    %v152 = vadd.f32 %v68, %v151
    %v153 = vpop.f32.mrb[0].mxu0
    %154 = vdwg.mxu0
    %v155 = vmax.f32 %v137, 0.0
    %v156 = vmax.f32 %v142, 0.0
    %v157 = vmax.f32 %v147, 0.0
    %v158 = vmax.f32 %v152, 0.0
    %159 = vst [vmem:[#allocation7] sm:$0xff] %v155
    %160 = vst [vmem:[#allocation7 + $0x8] sm:$0xff] %v156
    %161 = vst [vmem:[#allocation7 + $0x10] sm:$0xff] %v157
    %162 = vst [vmem:[#allocation7 + $0x18] sm:$0xff] %v158
    // Predicated region
    $region22: #{tpu_custom_call.1} parent=1 // pred_check
      _
    $region23: #{tpu_custom_call.1} parent=1 // pred_check_branch
      %164 = sbr.rel (0) target = $region25
    $region24: #{tpu_custom_call.1} parent=1 // pred_region
      %s166 = ssub.s32 512, 512
      %167 = vsyncadd [#allocation4], %s166
      %s168 = sshll.u32 [#allocation7], 4
      %s169 = int_to_ptr.vmem [resolvable:$true] %s168
      %174 = dma.vmem_to_hbm [thread:$0]  %s169, 512, %s3, [#allocation4], 128, 128, 8
    $region25: #{tpu_custom_call.1} parent=1 // pred_fallthru
      _
    // Predicated region
    $region26: #{tpu_custom_call.1} parent=1 // pred_check
      _
    $region27: #{tpu_custom_call.1} parent=1 // pred_check_branch
      %176 = sbr.rel (0) target = $region29
    $region28: #{tpu_custom_call.1} parent=1 // pred_region
      %177 = dma.done [#allocation4], 512
    $region29: #{tpu_custom_call.1} parent=1 // pred_fallthru
      _
    %178 = vsyncpa [#allocation3], 1
    %179 = vsyncpa [#allocation6], 1
    %180 = vsyncpa [#allocation4], 1

</llo_original>
